<compile_context>
chip_gen: v7x
topology: tpu7x:2x2x1
jax: 0.10.0
libtpu: 0.0.40
codegen_flags: <defaults>
</compile_context>

<pallas_src>
import itertools

import jax
import jax.numpy as jnp
import numpy as np
from jax.experimental import pallas as pl
from jax.experimental.pallas import tpu as pltpu

try:  # optional, exact Hungarian solver on host
    from scipy.optimize import linear_sum_assignment as _scipy_lsa
except Exception:  # pragma: no cover
    _scipy_lsa = None


def _round_up(x: int, m: int) -> int:
    return (x + m - 1) // m * m


# ---------------------------------------------------------------------------
# Pallas kernel
# ---------------------------------------------------------------------------
def _make_cost_kernel(point_sign: float):
    """Kernel body closed over the (static) sign of cost_point."""

    def cost_kernel(coords_ref, logits_ref, gt_pts_ref, onehot_ref, c_ref):
        # coords_ref : (TQ, 2)   predicted points, pre-scaled by |cost_point|
        # logits_ref : (TQ, C)   predicted logits
        # gt_pts_ref : (2,  TM)  GT points (transposed), pre-scaled by |cost_point|
        # onehot_ref : (C,  TM)  cost_class * one_hot(gt_labels); padded cols = 0
        # c_ref      : (TQ, TM)  output cost tile (lane-dense)

        # ---- pairwise L2 distance (torch.cdist, p=2) -- pure VPU ----
        q = coords_ref[...]                                   # (TQ, 2)
        qx = q[:, 0:1]
        qy = q[:, 1:2]
        px = gt_pts_ref[0:1, :]                               # (1, TM)
        py = gt_pts_ref[1:2, :]
        dx = qx - px                                          # (TQ, TM)
        dy = qy - py
        dist = jnp.sqrt(dx * dx + dy * dy)                    # == |cost_point|*cdist
        if point_sign < 0.0:                                  # static branch
            dist = -dist

        # ---- softmax gather; exact reciprocal ((TQ,1) -> essentially free) ----
        logits = logits_ref[...]                              # (TQ, C)
        m = jnp.max(logits, axis=-1, keepdims=True)
        e = jnp.exp(logits - m)                               # (TQ, C)
        inv_s = pl.reciprocal(jnp.sum(e, axis=-1, keepdims=True),
                              approx=False)                   # (TQ, 1)
        # gather prob[:, gt_labels] via one-hot matmul; cost_class already
        # folded into onehot (matmul is linear), MXU is otherwise idle.
        gathered = jnp.dot(e, onehot_ref[...],
                           preferred_element_type=jnp.float32)  # (TQ, TM)

        c_ref[...] = (dist - gathered * inv_s).astype(c_ref.dtype)

    return cost_kernel


def _resident_spec(block_shape, index_map):
    """Single-buffer inputs whose block changes at most once per image (saves
    VMEM vs. default double-buffering).  Falls back if this JAX build does not
    expose BlockSpec.pipeline_mode / pl.Buffered."""
    try:
        return pl.BlockSpec(block_shape, index_map,
                            pipeline_mode=pl.Buffered(1))
    except (AttributeError, TypeError):
        return pl.BlockSpec(block_shape, index_map)


# ---------------------------------------------------------------------------
# Wrapper: per-image cost blocks
# ---------------------------------------------------------------------------
def hungarian_cost_blocks(pred_coords, pred_logits, gt_points_list,
                          gt_labels_list, cost_point, cost_class,
                          *, tile_q=None, tile_m=2048,
                          out_dtype=jnp.float32):
    """Per-image matching-cost blocks, returned as a padded (B, Q_pad, M_pad)
    array.  Padded rows/columns hold finite garbage; callers crop
    [b, :Q, :n_b] on the host (no device-side crop)."""
    bs, num_queries, _ = pred_coords.shape
    num_classes = int(pred_logits.shape[-1])

    gt_nums = [int(np.shape(p)[0]) for p in gt_points_list]
    max_n = max(gt_nums + [1])
    Mp = _round_up(max_n, 128)                 # lane-dense output columns

    # ---- tile selection: big tiles, no forced multi-step split ----
    if tile_q is None:
        tile_q = 2048 if Mp <= 256 else (1024 if Mp <= 1024 else 512)
    tq = min(_round_up(int(tile_q), 8), _round_up(num_queries, 8))
    tm = min(_round_up(int(tile_m), 128), Mp)

    lane_c = _round_up(num_classes, 128)
    sub_c = _round_up(num_classes, 8)

    def _vmem_bytes(tq_, tm_):
        # conservative: everything double-buffered, lane/sublane padded
        return 4 * (2 * tq_ * 128          # coords tile (2 -> 128 lane pad)
                    + 2 * tq_ * lane_c     # logits tile
                    + 2 * 8 * tm_          # gt-points tile
                    + 2 * sub_c * tm_      # one-hot tile
                    + 2 * tq_ * tm_)       # output tile

    budget = 24 * 1024 * 1024              # fits every generation's scoped VMEM
    while _vmem_bytes(tq, tm) > budget and tq > 256:
        tq = max(256, _round_up(tq // 2, 8))
    while _vmem_bytes(tq, tm) > budget and tm > 512:
        tm = max(512, _round_up(tm // 2, 128))

    Qp = _round_up(num_queries, tq)
    Mp = _round_up(Mp, tm)                  # exact multiple of tile_m

    point_scale = abs(float(cost_point))
    point_sign = 1.0 if float(cost_point) >= 0.0 else -1.0

    # ---- fold cost_point into the coordinates (O(N+M) wrapper work) ----
    coords = jnp.asarray(pred_coords, jnp.float32) * point_scale   # (B, Q, 2)
    logits = jnp.asarray(pred_logits, jnp.float32)                 # (B, Q, C)
    if Qp != num_queries:
        coords = jnp.pad(coords, ((0, 0), (0, Qp - num_queries), (0, 0)))
        logits = jnp.pad(logits, ((0, 0), (0, Qp - num_queries), (0, 0)))

    # Per-image transposed GT points and cost_class-scaled one-hot gather
    # matrices (host-side plumbing, O(B*(C+2)*Mp) -- tiny vs. the kernel).
    gt_pts_b = np.zeros((bs, 2, Mp), np.float32)
    labels_b = np.full((bs, Mp), -1, np.int64)   # -1 -> all-zero one-hot column
    for b in range(bs):
        n = gt_nums[b]
        if n:
            gt_pts_b[b, :, :n] = (np.asarray(gt_points_list[b], np.float32).T
                                  * point_scale)
            labels_b[b, :n] = np.asarray(gt_labels_list[b]).astype(np.int64)
    onehot_b = (labels_b[:, None, :] ==
                np.arange(num_classes, dtype=np.int64)[None, :, None])
    onehot_b = onehot_b.astype(np.float32) * float(cost_class)      # (B, C, Mp)

    gt_pts_b = jnp.asarray(gt_pts_b)
    onehot_b = jnp.asarray(onehot_b)

    kernel = _make_cost_kernel(point_sign)
    grid = (bs, Qp // tq, Mp // tm)

    cost_est = pl.CostEstimate(
        flops=int(bs * Qp * Mp * (2 * num_classes + 10)),
        transcendentals=int(bs * Qp * num_classes * grid[2]
                            + bs * Qp * Mp + bs * Qp),
        bytes_accessed=int(4 * (bs * Qp * (2 + num_classes)
                                + bs * (2 + num_classes) * Mp
                                + bs * Qp * Mp)),
    )

    c = pl.pallas_call(
        kernel,
        out_shape=jax.ShapeDtypeStruct((bs, Qp, Mp), out_dtype),
        grid=grid,
        in_specs=[
            pl.BlockSpec((None, tq, 2), lambda b, i, j: (b, i, 0)),
            pl.BlockSpec((None, tq, num_classes), lambda b, i, j: (b, i, 0)),
            _resident_spec((None, 2, tm), lambda b, i, j: (b, 0, j)),
            _resident_spec((None, num_classes, tm), lambda b, i, j: (b, 0, j)),
        ],
        out_specs=pl.BlockSpec((None, tq, tm), lambda b, i, j: (b, i, j)),
        compiler_params=pltpu.CompilerParams(
            dimension_semantics=("parallel", "parallel", "arbitrary"),
            vmem_limit_bytes=int(min(56 * 1024 * 1024,
                                     max(32 * 1024 * 1024,
                                         2 * _vmem_bytes(tq, tm)))),
        ),
        cost_estimate=cost_est,
    )(coords, logits, gt_pts_b, onehot_b)

    # NOTE: out_dtype=jnp.bfloat16 would halve output HBM + PCIe traffic but
    # can flip near-tie assignments; kept at float32 by default.
    return c   # (B, Qp, Mp) padded; crop on host


# ---------------------------------------------------------------------------
# Host-side assignment (no Pallas equivalent: sequential Hungarian algorithm).
# TODO(synk): linear_sum_assignment runs on host; scipy if present, exact
#             brute force fallback only for the small demo shapes.
# ---------------------------------------------------------------------------
def _linear_sum_assignment_bruteforce(cost):
    cost = np.asarray(cost)
    n_rows, n_cols = cost.shape
    if n_rows == 0 or n_cols == 0:
        return np.zeros(0, np.int64), np.zeros(0, np.int64)
    assert n_rows >= n_cols, "expects more predictions than targets"
    cols = list(range(n_cols))
    best_rows, best_cost = None, np.inf
    for rows in itertools.permutations(range(n_rows), n_cols):
        c = cost[list(rows), cols].sum()
        if c < best_cost:
            best_cost, best_rows = c, rows
    row_ind = np.asarray(best_rows, dtype=np.int64)
    col_ind = np.arange(n_cols, dtype=np.int64)
    order = np.argsort(row_ind)
    return row_ind[order], col_ind[order]


def _linear_sum_assignment(cost):
    cost = np.asarray(cost)
    if cost.shape[0] == 0 or cost.shape[1] == 0:
        return np.zeros(0, np.int64), np.zeros(0, np.int64)
    if _scipy_lsa is not None:
        r, c = _scipy_lsa(cost)
        return np.asarray(r, dtype=np.int64), np.asarray(c, dtype=np.int64)
    return _linear_sum_assignment_bruteforce(cost)


def hungarian_matcher_forward(outputs, targets, cost_point, cost_class):
    """JAX/Pallas equivalent of HungarianMatcher.forward.

    Returns a list of (row_idx, col_idx) int64 numpy arrays, one per image,
    matching the PyTorch module's return structure."""
    pred_coords = outputs["pred_coords"]
    pred_logits = outputs["pred_logits"]
    gt_points_list = targets["gt_points"]
    gt_labels_list = targets["gt_labels"]
    gt_nums = [int(n) for n in targets["gt_nums"]]

    bs, num_queries = pred_coords.shape[:2]
    C_blocks = hungarian_cost_blocks(pred_coords, pred_logits,
                                     gt_points_list, gt_labels_list,
                                     cost_point, cost_class)
    C_np = np.asarray(jax.block_until_ready(C_blocks))   # crop on host

    indices = []
    for b in range(bs):
        n = gt_nums[b]
        if n == 0:
            indices.append((np.zeros(0, np.int64), np.zeros(0, np.int64)))
            continue
        sub = C_np[b, :num_queries, :n]
        indices.append(_linear_sum_assignment(sub))
    return indices


# ---------------------------------------------------------------------------
# Pure-JAX reference (matches the PyTorch math, in f32) for validation.
# ---------------------------------------------------------------------------
def _reference_cost(pred_coords, pred_logits, gt_points, gt_labels,
                    cost_point, cost_class):
    bs, num_queries, _ = pred_coords.shape
    coords = pred_coords.reshape(bs * num_queries, 2)
    logits = pred_logits.reshape(bs * num_queries, -1)
    d = jnp.sqrt(jnp.sum((coords[:, None, :] - gt_points[None, :, :]) ** 2,
                         axis=-1))
    prob = jax.nn.softmax(logits, axis=-1)
    cc = -prob[:, gt_labels]
    return cost_point * d + cost_class * cc


if __name__ == "__main__":
    key = jax.random.PRNGKey(0)
    bs, num_queries, num_classes = 2, 8, 32
    gt_nums = [4, 5]
    M = sum(gt_nums)

    k1, k2, k3, k4 = jax.random.split(key, 4)
    pred_coords = jax.random.uniform(k1, (bs, num_queries, 2),
                                     dtype=jnp.float32)
    pred_logits = jax.random.normal(k2, (bs, num_queries, num_classes),
                                    dtype=jnp.float32)
    gt_points_all = jax.random.uniform(k3, (M, 2), dtype=jnp.float32)
    gt_labels_all = jax.random.randint(k4, (M,), 0, num_classes,
                                       dtype=jnp.int32)

    # split concatenated gt into per-image lists (as the torch module expects)
    gt_points = [gt_points_all[:gt_nums[0]], gt_points_all[gt_nums[0]:]]
    gt_labels = [gt_labels_all[:gt_nums[0]], gt_labels_all[gt_nums[0]:]]

    outputs = {"pred_coords": pred_coords, "pred_logits": pred_logits}
    targets = {"gt_points": gt_points, "gt_labels": gt_labels,
               "gt_nums": gt_nums}

    cost_point, cost_class = 0.05, 1.0

    # ---- kernel cost blocks vs. full-matrix reference (per-image slices) ----
    C_blocks = hungarian_cost_blocks(pred_coords, pred_logits,
                                     gt_points, gt_labels,
                                     cost_point, cost_class)
    C_blocks = np.asarray(jax.block_until_ready(C_blocks))

    C_ref = _reference_cost(pred_coords, pred_logits, gt_points_all,
                            gt_labels_all, cost_point, cost_class)
    C_ref = np.asarray(C_ref).reshape(bs, num_queries, M)
    start = 0
    for b, n in enumerate(gt_nums):
        np.testing.assert_allclose(C_blocks[b, :num_queries, :n],
                                   C_ref[b, :, start:start + n],
                                   rtol=1e-4, atol=1e-5)
        start += n

    # ---- full forward (host Hungarian assignment) ----
    indices = hungarian_matcher_forward(outputs, targets,
                                        cost_point, cost_class)
    for (i_idx, j_idx), n in zip(indices, gt_nums):
        assert len(i_idx) == n and len(j_idx) == n
        assert len(set(int(v) for v in i_idx)) == n  # 1-to-1 matching

    print("KERNEL_OK")
</pallas_src>

<mosaic_0001>
module attributes {stable_mosaic.version = 11 : i64} {
  func.func @cost_kernel(%arg0: i32, %arg1: i32, %arg2: i32, %arg3: memref<1x8x2xf32, #tpu.memory_space<vmem>>, %arg4: memref<1x8x32xf32, #tpu.memory_space<vmem>>, %arg5: memref<1x2x128xf32, #tpu.memory_space<vmem>>, %arg6: memref<1x32x128xf32, #tpu.memory_space<vmem>>, %arg7: memref<1x8x128xf32, #tpu.memory_space<vmem>>) attributes {dimension_semantics = [#tpu.dimension_semantics<parallel>, #tpu.dimension_semantics<parallel>, #tpu.dimension_semantics<arbitrary>], iteration_bounds = array<i64: 2, 1, 1>, scalar_prefetch = 0 : i64, scratch_operands = 0 : i64, tpu.core_type = #tpu.core_type<tc>, window_params = [{transform_indices = @transform_0, window_bounds = array<i64: 1, 8, 2>}, {transform_indices = @transform_1, window_bounds = array<i64: 1, 8, 32>}, {pipeline_mode = #tpu.pipeline_mode<synchronous>, transform_indices = @transform_2, window_bounds = array<i64: 1, 2, 128>}, {pipeline_mode = #tpu.pipeline_mode<synchronous>, transform_indices = @transform_3, window_bounds = array<i64: 1, 32, 128>}, {transform_indices = @transform_4, window_bounds = array<i64: 1, 8, 128>}]} {
    %c0 = arith.constant 0 : index
    %c0_0 = arith.constant 0 : index
    %c0_1 = arith.constant 0 : index
    %0 = vector.load %arg3[%c0, %c0_0, %c0_1] : memref<1x8x2xf32, #tpu.memory_space<vmem>>, vector<1x8x2xf32>
    %1 = vector.shape_cast %0 : vector<1x8x2xf32> to vector<8x2xf32>
    %2 = vector.extract_strided_slice %1 {offsets = [0, 0], sizes = [8, 1], strides = [1, 1]} : vector<8x2xf32> to vector<8x1xf32>
    %3 = vector.extract_strided_slice %1 {offsets = [0, 1], sizes = [8, 1], strides = [1, 1]} : vector<8x2xf32> to vector<8x1xf32>
    %c0_2 = arith.constant 0 : index
    %c0_3 = arith.constant 0 : index
    %c0_4 = arith.constant 0 : index
    %4 = vector.load %arg5[%c0_2, %c0_3, %c0_4] : memref<1x2x128xf32, #tpu.memory_space<vmem>>, vector<1x1x128xf32>
    %5 = vector.shape_cast %4 : vector<1x1x128xf32> to vector<1x128xf32>
    %c0_5 = arith.constant 0 : index
    %c1 = arith.constant 1 : index
    %c0_6 = arith.constant 0 : index
    %6 = vector.load %arg5[%c0_5, %c1, %c0_6] : memref<1x2x128xf32, #tpu.memory_space<vmem>>, vector<1x1x128xf32>
    %7 = vector.shape_cast %6 : vector<1x1x128xf32> to vector<1x128xf32>
    %8 = vector.broadcast %2 : vector<8x1xf32> to vector<8x128xf32>
    %9 = vector.broadcast %5 : vector<1x128xf32> to vector<8x128xf32>
    %10 = arith.subf %8, %9 : vector<8x128xf32>
    %11 = vector.broadcast %3 : vector<8x1xf32> to vector<8x128xf32>
    %12 = vector.broadcast %7 : vector<1x128xf32> to vector<8x128xf32>
    %13 = arith.subf %11, %12 : vector<8x128xf32>
    %14 = arith.mulf %10, %10 : vector<8x128xf32>
    %15 = arith.mulf %13, %13 : vector<8x128xf32>
    %16 = arith.addf %14, %15 : vector<8x128xf32>
    %17 = math.sqrt %16 : vector<8x128xf32>
    %c0_7 = arith.constant 0 : index
    %c0_8 = arith.constant 0 : index
    %c0_9 = arith.constant 0 : index
    %18 = vector.load %arg4[%c0_7, %c0_8, %c0_9] : memref<1x8x32xf32, #tpu.memory_space<vmem>>, vector<1x8x32xf32>
    %19 = vector.shape_cast %18 : vector<1x8x32xf32> to vector<8x32xf32>
    %cst = arith.constant dense<0xFF800000> : vector<8xf32>
    %20 = vector.multi_reduction <maximumf>, %19, %cst [1] : vector<8x32xf32> to vector<8xf32>
    %21 = vector.shape_cast %20 : vector<8xf32> to vector<8x1xf32>
    %22 = vector.broadcast %21 : vector<8x1xf32> to vector<8x32xf32>
    %23 = arith.subf %19, %22 : vector<8x32xf32>
    %24 = math.exp %23 : vector<8x32xf32>
    %cst_10 = arith.constant dense<0.000000e+00> : vector<8xf32>
    %25 = vector.multi_reduction <add>, %24, %cst_10 [1] : vector<8x32xf32> to vector<8xf32>
    %26 = vector.shape_cast %25 : vector<8xf32> to vector<8x1xf32>
    %27 = tpu.reciprocal %26 : vector<8x1xf32> -> vector<8x1xf32>
    %c0_11 = arith.constant 0 : index
    %c0_12 = arith.constant 0 : index
    %c0_13 = arith.constant 0 : index
    %28 = vector.load %arg6[%c0_11, %c0_12, %c0_13] : memref<1x32x128xf32, #tpu.memory_space<vmem>>, vector<1x32x128xf32>
    %29 = vector.shape_cast %28 : vector<1x32x128xf32> to vector<32x128xf32>
    %cst_14 = arith.constant dense<0.000000e+00> : vector<8x128xf32>
    %30 = tpu.matmul %24, %29, %cst_14 {dimension_numbers = #tpu.dot_dimension_numbers<[1], [0], [0], [1], [0, 0, 1, 1], [], []>} : vector<8x32xf32>, vector<32x128xf32>, vector<8x128xf32> -> vector<8x128xf32>
    %31 = vector.broadcast %27 : vector<8x1xf32> to vector<8x128xf32>
    %32 = arith.mulf %30, %31 : vector<8x128xf32>
    %33 = arith.subf %17, %32 : vector<8x128xf32>
    %c0_15 = arith.constant 0 : index
    %c0_16 = arith.constant 0 : index
    %c0_17 = arith.constant 0 : index
    %34 = vector.load %arg7[%c0_15, %c0_16, %c0_17] : memref<1x8x128xf32, #tpu.memory_space<vmem>>, vector<1x8x128xf32>
    %35 = vector.shape_cast %34 : vector<1x8x128xf32> to vector<8x128xf32>
    %36 = vector.shape_cast %33 : vector<8x128xf32> to vector<1x8x128xf32>
    tpu.vector_store %arg7[%c0_15, %c0_16, %c0_17], %36 {strides = array<i32>} : memref<1x8x128xf32, #tpu.memory_space<vmem>>, vector<1x8x128xf32>,
    return
  }
  func.func @transform_0(%arg0: i32, %arg1: i32, %arg2: i32) -> (i32, i32, i32) {
    %c0_i32 = arith.constant 0 : i32
    %c0_i32_0 = arith.constant 0 : i32
    return %arg0, %arg1, %c0_i32 : i32, i32, i32
  }
  func.func @transform_1(%arg0: i32, %arg1: i32, %arg2: i32) -> (i32, i32, i32) {
    %c0_i32 = arith.constant 0 : i32
    %c0_i32_0 = arith.constant 0 : i32
    return %arg0, %arg1, %c0_i32 : i32, i32, i32
  }
  func.func @transform_2(%arg0: i32, %arg1: i32, %arg2: i32) -> (i32, i32, i32) {
    %c0_i32 = arith.constant 0 : i32
    %c0_i32_0 = arith.constant 0 : i32
    return %arg0, %c0_i32, %arg2 : i32, i32, i32
  }
  func.func @transform_3(%arg0: i32, %arg1: i32, %arg2: i32) -> (i32, i32, i32) {
    %c0_i32 = arith.constant 0 : i32
    %c0_i32_0 = arith.constant 0 : i32
    return %arg0, %c0_i32, %arg2 : i32, i32, i32
  }
  func.func @transform_4(%arg0: i32, %arg1: i32, %arg2: i32) -> (i32, i32, i32) {
    %c0_i32 = arith.constant 0 : i32
    return %arg0, %arg1, %arg2 : i32, i32, i32
  }
}

</mosaic_0001>

<llo_original>
// kernel: tpu_custom_call.1
$region0: #{tpu_custom_call.1}
  #allocation0 [shape = 'u32[]', space=smem, size = 0x4, offset = 0x4, fixed_abs, tag = 'smem constant byte address 0x4 - core index']
  #allocation1 [shape = 'u32[144,128]{1,0:T(1,128)}', space=vmem, size = 0x12000, scoped, tag = 'internal scratch']
  %s0 = inlined_call_operand.vmem [shape: f32[2,8,2], index: 0, kind: input, shape index: {}]
  %s1 = inlined_call_operand.vmem [shape: f32[2,8,32], index: 1, kind: input, shape index: {}]
  %s2 = inlined_call_operand.vmem [shape: f32[2,2,128], index: 2, kind: input, shape index: {}]
  %s3 = inlined_call_operand.hbm [shape: f32[2,32,128], index: 3, kind: input, shape index: {}]
  %s4 = inlined_call_operand.hbm [shape: f32[2,8,128], index: 4, kind: output, shape index: {}]
  %s5 = sld [smem:[#allocation0]]
  $region53: #{tpu_custom_call.1} parent=0
    _
  %s7 = ssub.s32 1, %s5
  %s8 = scalar_select 0, %s7, %s5
  $region1: #{tpu_custom_call.1} parent=0
    #allocation2 [shape = 'u8[16384]{0}', space=vmem, size = 0x4000, scoped, tag = 'input window, operand 3, single buffered']
    #allocation3 [shape = 's32[2]{0}', space=sflag, size = 0x8, scoped, tag = 'scoped memory for tpu_custom_call.1']
    #allocation4 [shape = 's32[2]{0}', space=sflag, size = 0x8, scoped, tag = 'scoped memory for tpu_custom_call.1']
    #allocation5 [shape = 'u8[8192]{0}', space=vmem, size = 0x2000, scoped, tag = 'output window, operand 0']
    %9 = vsyncpa [#allocation3], 0
    %10 = vsyncpa [#allocation4], 0
    %s11 = scalar_lea.sflag [#allocation4], 1
    %12 = vsyncpa %s11, 0
    loop: start=0, step=1, limit=4
    $region2: #{tpu_custom_call.1} parent=1 // loop_pre_header
      _
    $region3: #{tpu_custom_call.1} parent=1 // loop_header
      %s14 = sphi 0, %s18
      %p15 = scmp.ge.s32.totalorder %s14, 4
      %s21 = sphi 0, %s40
      %s22 = sphi 0, %s36
      %s23 = sphi 0, %s32
      %s24 = sphi 0, %s21
      %s25 = sphi 0, %s22
      %s26 = sphi 0, %s23
      %s27 = sphi 0, %s24
      %s28 = sphi 0, %s25
      %s29 = sphi 0, %s26
      %s45 = sphi 0, %s47
      %s48 = sphi 0, %s45
      %s49 = sphi 0, %s48
      %s65 = sphi 0, %s49
      %s73 = sphi 0, %s75
      %s76 = sphi 0, %s73
      %s77 = sphi 0, %s76
      %s93 = sphi 0, %s77
      %s101 = sphi 0, %s103
      %s104 = sphi 0, %s101
      %s105 = sphi 0, %s104
      %s121 = sphi 0, %s105
      %s129 = sphi 0, %s131
      %s132 = sphi 0, %s129
      %s133 = sphi 0, %s132
      %s149 = sphi 0, %s133
      %s159 = sphi 0, %s161
      %s162 = sphi 0, %s159
      %s163 = sphi 0, %s162
      %s179 = sphi 0, %s163
    $region4: #{tpu_custom_call.1} parent=1 // loop_header_branch
      %17 = sbr.rel (%p15) target = $region8
    $region5: #{tpu_custom_call.1} parent=1 // loop_body
      %s19 = ssub.s32 %s14, 1
      %s20 = ssub.s32 %s14, 2
      %s30 = sadd.s32 1, %s23
      %p31 = scmp.ge.s32.totalorder %s30, 1
      %s32 = scalar_select %p31, 0, %s30
      %s33 = sadd.s32 1, %s22
      %s34 = scalar_select %p31, %s33, %s22
      %p35 = scmp.ge.s32.totalorder %s34, 1
      %s36 = scalar_select %p35, 0, %s34
      %s37 = sadd.s32 1, %s21
      %s38 = scalar_select %p35, %s37, %s21
      %p39 = scmp.ge.s32.totalorder %s38, 2
      %s40 = scalar_select %p39, 0, %s38
      %s41 = ssub.s32 %s21, %s40
      %s42 = ssub.s32 %s22, %s36
      %s43 = sor.u32 %s41, %s42
      %p44 = scmp.eq.s32.totalorder %s43, 0
      %s46 = sadd.s32 %s45, 1
      %s47 = scalar_select %p44, %s45, %s46
      %p50 = pneg %p44
      %p51 = scmp.eq.s32.totalorder %s14, 1
      %p52 = por %p50, %p51
      %p53 = scmp.ne.s32.totalorder %s45, %s48
      %p54 = scmp.eq.s32.totalorder %s14, 0
      %p55 = por %p53, %p54
      %p56 = scmp.ne.s32.totalorder %s45, %s48
      %p57 = scmp.eq.s32.totalorder %s19, 1
      %p58 = por %p56, %p57
      %p59 = scmp.ne.s32.totalorder %s48, %s49
      %p60 = scmp.eq.s32.totalorder %s19, 0
      %p61 = por %p59, %p60
      %p62 = scmp.ne.s32.totalorder %s48, %s49
      %p63 = scmp.eq.s32.totalorder %s20, 1
      %p64 = por %p62, %p63
      %p66 = scmp.ne.s32.totalorder %s49, %s65
      %p67 = scmp.eq.s32.totalorder %s20, 0
      %p68 = por %p66, %p67
      %s69 = ssub.s32 %s21, %s40
      %s70 = ssub.s32 %s22, %s36
      %s71 = sor.u32 %s69, %s70
      %p72 = scmp.eq.s32.totalorder %s71, 0
      %s74 = sadd.s32 %s73, 1
      %s75 = scalar_select %p72, %s73, %s74
      %p78 = pneg %p72
      %p79 = scmp.eq.s32.totalorder %s14, 1
      %p80 = por %p78, %p79
      %p81 = scmp.ne.s32.totalorder %s73, %s76
      %p82 = scmp.eq.s32.totalorder %s14, 0
      %p83 = por %p81, %p82
      %p84 = scmp.ne.s32.totalorder %s73, %s76
      %p85 = scmp.eq.s32.totalorder %s19, 1
      %p86 = por %p84, %p85
      %p87 = scmp.ne.s32.totalorder %s76, %s77
      %p88 = scmp.eq.s32.totalorder %s19, 0
      %p89 = por %p87, %p88
      %p90 = scmp.ne.s32.totalorder %s76, %s77
      %p91 = scmp.eq.s32.totalorder %s20, 1
      %p92 = por %p90, %p91
      %p94 = scmp.ne.s32.totalorder %s77, %s93
      %p95 = scmp.eq.s32.totalorder %s20, 0
      %p96 = por %p94, %p95
      %s97 = ssub.s32 %s21, %s40
      %s98 = ssub.s32 %s23, %s32
      %s99 = sor.u32 %s97, %s98
      %p100 = scmp.eq.s32.totalorder %s99, 0
      %s102 = sadd.s32 %s101, 1
      %s103 = scalar_select %p100, %s101, %s102
      %p106 = pneg %p100
      %p107 = scmp.eq.s32.totalorder %s14, 1
      %p108 = por %p106, %p107
      %p109 = scmp.ne.s32.totalorder %s101, %s104
      %p110 = scmp.eq.s32.totalorder %s14, 0
      %p111 = por %p109, %p110
      %p112 = scmp.ne.s32.totalorder %s101, %s104
      %p113 = scmp.eq.s32.totalorder %s19, 1
      %p114 = por %p112, %p113
      %p115 = scmp.ne.s32.totalorder %s104, %s105
      %p116 = scmp.eq.s32.totalorder %s19, 0
      %p117 = por %p115, %p116
      %p118 = scmp.ne.s32.totalorder %s104, %s105
      %p119 = scmp.eq.s32.totalorder %s20, 1
      %p120 = por %p118, %p119
      %p122 = scmp.ne.s32.totalorder %s105, %s121
      %p123 = scmp.eq.s32.totalorder %s20, 0
      %p124 = por %p122, %p123
      %s125 = ssub.s32 %s21, %s40
      %s126 = ssub.s32 %s23, %s32
      %s127 = sor.u32 %s125, %s126
      %p128 = scmp.eq.s32.totalorder %s127, 0
      %s130 = sadd.s32 %s129, 1
      %s131 = scalar_select %p128, %s129, %s130
      %p134 = pneg %p128
      %p135 = scmp.eq.s32.totalorder %s14, 1
      %p136 = por %p134, %p135
      %p137 = scmp.ne.s32.totalorder %s129, %s132
      %p138 = scmp.eq.s32.totalorder %s14, 0
      %p139 = por %p137, %p138
      %p140 = scmp.ne.s32.totalorder %s129, %s132
      %p141 = scmp.eq.s32.totalorder %s19, 1
      %p142 = por %p140, %p141
      %p143 = scmp.ne.s32.totalorder %s132, %s133
      %p144 = scmp.eq.s32.totalorder %s19, 0
      %p145 = por %p143, %p144
      %p146 = scmp.ne.s32.totalorder %s132, %s133
      %p147 = scmp.eq.s32.totalorder %s20, 1
      %p148 = por %p146, %p147
      %p150 = scmp.ne.s32.totalorder %s133, %s149
      %p151 = scmp.eq.s32.totalorder %s20, 0
      %p152 = por %p150, %p151
      %s153 = ssub.s32 %s21, %s40
      %s154 = ssub.s32 %s22, %s36
      %s155 = sor.u32 %s153, %s154
      %s156 = ssub.s32 %s23, %s32
      %s157 = sor.u32 %s155, %s156
      %p158 = scmp.eq.s32.totalorder %s157, 0
      %s160 = sadd.s32 %s159, 1
      %s161 = scalar_select %p158, %s159, %s160
      %p164 = pneg %p158
      %p165 = scmp.eq.s32.totalorder %s14, 1
      %p166 = por %p164, %p165
      %p167 = scmp.ne.s32.totalorder %s159, %s162
      %p168 = scmp.eq.s32.totalorder %s14, 0
      %p169 = por %p167, %p168
      %p170 = scmp.ne.s32.totalorder %s159, %s162
      %p171 = scmp.eq.s32.totalorder %s19, 1
      %p172 = por %p170, %p171
      %p173 = scmp.ne.s32.totalorder %s162, %s163
      %p174 = scmp.eq.s32.totalorder %s19, 0
      %p175 = por %p173, %p174
      %p176 = scmp.ne.s32.totalorder %s162, %s163
      %p177 = scmp.eq.s32.totalorder %s20, 1
      %p178 = por %p176, %p177
      %p180 = scmp.ne.s32.totalorder %s163, %s179
      %p181 = scmp.eq.s32.totalorder %s20, 0
      %p182 = por %p180, %p181
      %p183 = scmp.le.s32.totalorder 1, %s14
      %p184 = scmp.lt.s32.totalorder %s14, 3
      %p185 = pnand %p183, %p184
      %p186 = pneg %p185
      // Predicated region
      $region9: #{tpu_custom_call.1} parent=5 // pred_check
        _
      $region10: #{tpu_custom_call.1} parent=5 // pred_check_branch
        %188 = sbr.rel (%p185) target = $region12
      $region11: #{tpu_custom_call.1} parent=5 // pred_region
        %s189 = ssub.s32 %s14, 1
        // Predicated region
        $region13: #{tpu_custom_call.1} parent=11 // pred_check
          %p190 = pneg %p117
        $region14: #{tpu_custom_call.1} parent=11 // pred_check_branch
          %192 = sbr.rel (%p190) target = $region16
        $region15: #{tpu_custom_call.1} parent=11 // pred_region
          %p193 = scmp.lt.s32.totalorder %s24, 1
          %s194 = scalar_select %p193, %s24, 1
          %p195 = scmp.lt.s32.totalorder %s26, 0
          %s196 = scalar_select %p195, %s26, 0
          %s197 = sadd.s32 %s196, %s194
          %s198 = smul.addr %s197, 2
          %s199 = scalar_lea.vmem %s2, %s198
        $region16: #{tpu_custom_call.1} parent=11 // pred_fallthru
          _
        // Predicated region
        $region17: #{tpu_custom_call.1} parent=11 // pred_check
          %p200 = pneg %p145
        $region18: #{tpu_custom_call.1} parent=11 // pred_check_branch
          %202 = sbr.rel (%p200) target = $region20
        $region19: #{tpu_custom_call.1} parent=11 // pred_region
          %s204 = ssub.s32 512, 512
          %205 = vsyncadd [#allocation3], %s204
          %s206 = smul.addr %s24, 4
          %s207 = sadd.s32 %s26, %s206
          %s208 = smul.addr %s207, 128
          %s209 = scalar_lea.hbm %s3, %s208
          %s210 = sshll.u32 [#allocation2], 4
          %s211 = int_to_ptr.vmem [resolvable:$true] %s210
          %216 = dma.hbm_to_vmem [thread:$0]  %s209, 512, %s211, [#allocation3], 128, 128, 8
        $region20: #{tpu_custom_call.1} parent=11 // pred_fallthru
          _
      $region12: #{tpu_custom_call.1} parent=5 // pred_fallthru
        _
      %p217 = scmp.lt.s32.totalorder %s14, 2
      // Predicated region
      $region21: #{tpu_custom_call.1} parent=5 // pred_check
        %p218 = pneg %p217
      $region22: #{tpu_custom_call.1} parent=5 // pred_check_branch
        %220 = sbr.rel (%p218) target = $region24
      $region23: #{tpu_custom_call.1} parent=5 // pred_region
        // Predicated region
        $region25: #{tpu_custom_call.1} parent=23 // pred_check
          %p221 = pneg %p55
        $region26: #{tpu_custom_call.1} parent=23 // pred_check_branch
          %223 = sbr.rel (%p221) target = $region28
        $region27: #{tpu_custom_call.1} parent=23 // pred_region
          %p224 = scmp.lt.s32.totalorder %s21, 1
          %s225 = scalar_select %p224, %s21, 1
          %p226 = scmp.lt.s32.totalorder %s22, 0
          %s227 = scalar_select %p226, %s22, 0
          %s228 = sadd.s32 %s227, %s225
          %s229 = smul.addr %s228, 8
          %s230 = scalar_lea.vmem %s0, %s229
        $region28: #{tpu_custom_call.1} parent=23 // pred_fallthru
          _
        // Predicated region
        $region29: #{tpu_custom_call.1} parent=23 // pred_check
          %p231 = pneg %p83
        $region30: #{tpu_custom_call.1} parent=23 // pred_check_branch
          %233 = sbr.rel (%p231) target = $region32
        $region31: #{tpu_custom_call.1} parent=23 // pred_region
          %p234 = scmp.lt.s32.totalorder %s21, 1
          %s235 = scalar_select %p234, %s21, 1
          %p236 = scmp.lt.s32.totalorder %s22, 0
          %s237 = scalar_select %p236, %s22, 0
          %s238 = sadd.s32 %s237, %s235
          %s239 = smul.addr %s238, 8
          %s240 = scalar_lea.vmem %s1, %s239
        $region32: #{tpu_custom_call.1} parent=23 // pred_fallthru
          _
      $region24: #{tpu_custom_call.1} parent=5 // pred_fallthru
        _
      %p241 = scmp.le.s32.totalorder 1, %s14
      %p242 = scmp.lt.s32.totalorder %s14, 3
      %p243 = pnand %p241, %p242
      %p244 = pneg %p243
      // Predicated region
      $region33: #{tpu_custom_call.1} parent=5 // pred_check
        _
      $region34: #{tpu_custom_call.1} parent=5 // pred_check_branch
        %246 = sbr.rel (%p243) target = $region36
      $region35: #{tpu_custom_call.1} parent=5 // pred_region
        %s247 = ssub.s32 %s14, 1
        // Predicated region
        $region37: #{tpu_custom_call.1} parent=35 // pred_check
          %p248 = pneg %p145
        $region38: #{tpu_custom_call.1} parent=35 // pred_check_branch
          %250 = sbr.rel (%p248) target = $region40
        $region39: #{tpu_custom_call.1} parent=35 // pred_region
          %251 = dma.done [#allocation3], 512
        $region40: #{tpu_custom_call.1} parent=35 // pred_fallthru
          _
        %p252 = scmp.lt.s32.totalorder %s24, 1
        %s253 = scalar_select %p252, %s24, 1
        %p254 = scmp.lt.s32.totalorder %s25, 0
        %s255 = scalar_select %p254, %s25, 0
        %s256 = sadd.s32 %s255, %s253
        %s257 = smul.addr %s256, 8
        %s258 = scalar_lea.vmem %s0, %s257
        %p259 = pneg %p61
        %p260 = pneg %p58
        %p261 = scmp.lt.s32.totalorder %s24, 1
        %s262 = scalar_select %p261, %s24, 1
        %p263 = scmp.lt.s32.totalorder %s25, 0
        %s264 = scalar_select %p263, %s25, 0
        %s265 = sadd.s32 %s264, %s262
        %s266 = smul.addr %s265, 8
        %s267 = scalar_lea.vmem %s1, %s266
        %p268 = pneg %p89
        %p269 = pneg %p86
        %p270 = scmp.lt.s32.totalorder %s24, 1
        %s271 = scalar_select %p270, %s24, 1
        %p272 = scmp.lt.s32.totalorder %s26, 0
        %s273 = scalar_select %p272, %s26, 0
        %s274 = sadd.s32 %s273, %s271
        %s275 = smul.addr %s274, 2
        %s276 = scalar_lea.vmem %s2, %s275
        %p277 = pneg %p117
        %p278 = pneg %p114
        %p279 = pneg %p145
        %p280 = pneg %p142
        %p281 = pneg %p175
        %p282 = pneg %p172
        %s283 = sand.u32 %s162, 1
        %s284 = scalar_lea.sflag [#allocation4], %s283
        %s285 = sand.u32 %s162, 1
        %s286 = smul.addr %s285, 8
        %s287 = scalar_lea.vmem [#allocation5], %s286
        %p288 = scmp.lt.s32.totalorder %s24, 1
        %s289 = scalar_select %p288, %s24, 1
        %p290 = scmp.lt.s32.totalorder %s25, 0
        %s291 = scalar_select %p290, %s25, 0
        %s292 = sadd.s32 %s291, %s289
        %s293 = smul.addr %s292, 8
        %s294 = scalar_lea.vmem %s0, %s293
        %p295 = scmp.lt.s32.totalorder %s24, 1
        %s296 = scalar_select %p295, %s24, 1
        %p297 = scmp.lt.s32.totalorder %s25, 0
        %s298 = scalar_select %p297, %s25, 0
        %s299 = sadd.s32 %s298, %s296
        %s300 = smul.addr %s299, 8
        %s301 = scalar_lea.vmem %s1, %s300
        %p302 = scmp.lt.s32.totalorder %s24, 1
        %s303 = scalar_select %p302, %s24, 1
        %p304 = scmp.lt.s32.totalorder %s26, 0
        %s305 = scalar_select %p304, %s26, 0
        %s306 = sadd.s32 %s305, %s303
        %s307 = smul.addr %s306, 2
        %s308 = scalar_lea.vmem %s2, %s307
        %v309 = vld [vmem:[%s294] sm:$0xff]
        %v310 = vld [vmem:[%s308] sm:$0x1]
        %v311 = vld [vmem:[%s308 + $0x1] sm:$0x1]
        %313 = vset.pattern.permute.xlu0 0
        %314 = vperm.xlu0 %313, %v309
        %v315 = vpop.permute.xlu0 %314
        %v317 = vlaneseq
        %v318 = vshrl.u32 %v317, 7
        %v319 = vsub.s32 0, %v318
        %v320 = vrot.slane %v310, %v319
        %v321 = vsub.f32 %v315, %v320
        %322 = vset.pattern.permute.xlu0 1
        %323 = vperm.xlu0 %322, %v309
        %v324 = vpop.permute.xlu0 %323
        %v326 = vlaneseq
        %v327 = vshrl.u32 %v326, 7
        %v328 = vsub.s32 0, %v327
        %v329 = vrot.slane %v311, %v328
        %v330 = vsub.f32 %v324, %v329
        %v331 = vmul.f32 %v321, %v321
        %v332 = vmul.f32 %v330, %v330
        %v333 = vadd.f32 %v331, %v332
        %v334 = vrsqrt.pop %v333
        %v335 = vmul.f32 %v333, %v334
        %vm336 = vcmp.eq.f32.partialorder %v333, inf
        %v337 = vsel %vm336, %v333, %v335
        %vm338 = vcmp.eq.f32.partialorder %v333, 0.0
        %v339 = vand.u32 %v333, 2147483648
        %v340 = vsel %vm338, %v339, %v337
        %v341 = vld [vmem:[%s301] sm:$0xff]
        %vm342 = vcmask 261120
        %v343 = vsel %vm342, %v341, -inf
        %344 = vmax.xlane.f32.xlu0 %v343
        %v345 = vpop.xlane.xlu0 %344
        %v346 = vsub.f32 %v341, %v345
        %v347 = vmul.f32 %v346, 1.442695
        %v348 = vpow.pop %v347
        %v349 = vsel %vm342, %v348, 0.0
        %350 = vadd.xlane.f32.xlu0 %v349
        %v351 = vpop.xlane.xlu0 %350
        %v352 = vrcp.pop %v351
        %v353 = vld [vmem:[#allocation2] sm:$0xff]
        %v354 = vld [vmem:[#allocation2 + $0x8] sm:$0xff]
        %v355 = vld [vmem:[#allocation2 + $0x10] sm:$0xff]
        %v356 = vld [vmem:[#allocation2 + $0x18] sm:$0xff]
        %v358 = vsel %vm342, %v348, 0
        %360 = vmatprep.subr.mxu0 0.0
        %361 = vmatpush1.msra.mxu0 %v353
        %362 = vmatprep.subr.mxu0 0.0
        %363 = vmatpush1.msra.mxu0 %v354
        %364 = vmatprep.subr.mxu0 0.0
        %365 = vmatpush1.msra.mxu0 %v355
        %366 = vmatprep.subr.mxu0 0.0
        %367 = vmatpush1.msra.mxu0 %v356
        %368 = vmatprep.subr.mxu0 0.0
        %369 = vmatpush1.msra.mxu0 0.0
        %370 = vmatprep.subr.mxu0 0.0
        %371 = vmatpush1.msra.mxu0 0.0
        %372 = vmatprep.subr.mxu0 0.0
        %373 = vmatpush1.msra.mxu0 0.0
        %374 = vmatprep.subr.mxu0 0.0
        %375 = vmatpush1.msra.mxu0 0.0
        %376 = vmatprep.subr.mxu0 0.0
        %377 = vmatpush1.msra.mxu0 0.0
        %378 = vmatprep.subr.mxu0 0.0
        %379 = vmatpush1.msra.mxu0 0.0
        %380 = vmatprep.subr.mxu0 0.0
        %381 = vmatpush1.msra.mxu0 0.0
        %382 = vmatprep.subr.mxu0 0.0
        %383 = vmatpush1.msra.mxu0 0.0
        %384 = vmatprep.subr.mxu0 0.0
        %385 = vmatpush1.msra.mxu0 0.0
        %386 = vmatprep.subr.mxu0 0.0
        %387 = vmatpush1.msra.mxu0 0.0
        %388 = vmatprep.subr.mxu0 0.0
        %389 = vmatpush1.msra.mxu0 0.0
        %390 = vmatprep.subr.mxu0 0.0
        %391 = vmatpush1.msra.mxu0 0.0
        %392 = vmatprep.subr.mxu0 0.0
        %393 = vmatpush1.msra.mxu0 0.0
        %394 = vmatprep.subr.mxu0 0.0
        %395 = vmatpush1.msra.mxu0 0.0
        %396 = vmatprep.subr.mxu0 0.0
        %397 = vmatpush1.msra.mxu0 0.0
        %398 = vmatprep.subr.mxu0 0.0
        %399 = vmatpush1.msra.mxu0 0.0
        %400 = vmatprep.subr.mxu0 0.0
        %401 = vmatpush1.msra.mxu0 0.0
        %402 = vmatprep.subr.mxu0 0.0
        %403 = vmatpush1.msra.mxu0 0.0
        %404 = vmatprep.subr.mxu0 0.0
        %405 = vmatpush1.msra.mxu0 0.0
        %406 = vmatprep.subr.mxu0 0.0
        %407 = vmatpush1.msra.mxu0 0.0
        %408 = vmatprep.subr.mxu0 0.0
        %409 = vmatpush1.msra.mxu0 0.0
        %410 = vmatprep.subr.mxu0 0.0
        %411 = vmatpush1.msra.mxu0 0.0
        %412 = vmatprep.subr.mxu0 0.0
        %413 = vmatpush1.msra.mxu0 0.0
        %414 = vmatprep.subr.mxu0 0.0
        %415 = vmatpush1.msra.mxu0 0.0
        %416 = vmatprep.subr.mxu0 0.0
        %417 = vmatpush1.msra.mxu0 0.0
        %418 = vmatprep.subr.mxu0 0.0
        %419 = vmatpush1.msra.mxu0 0.0
        %420 = vmatprep.subr.mxu0 0.0
        %421 = vmatpush1.msra.mxu0 0.0
        %422 = vmatprep.subr.mxu0 0.0
        %423 = vmatpush1.msra.mxu0 0.0
        %424 = vmatprep.mubr.f32.mxu0 0.0
        %425 = vmatmul.mubr.f32.gmra.mrb[0].mxu0 %v358
        %v426 = vpop.f32.mrb[0].mxu0
        %v427 = vadd.f32 0.0, %v426
        %v428 = vpop.f32.mrb[0].mxu0
        %429 = vdwg.mxu0
        %v430 = vmul.f32 %v427, %v352
        %v431 = vsub.f32 %v340, %v430
        %432 = vst [vmem:[%s287] sm:$0xff] %v431
        %s433 = sand.u32 %s162, 1
        %s434 = scalar_lea.sflag [#allocation4], %s433
        %s435 = sand.u32 %s162, 1
        %s436 = smul.addr %s435, 8
        %s437 = scalar_lea.vmem [#allocation5], %s436
        // Predicated region
        $region41: #{tpu_custom_call.1} parent=35 // pred_check
          %p438 = pneg %p172
        $region42: #{tpu_custom_call.1} parent=35 // pred_check_branch
          %440 = sbr.rel (%p438) target = $region44
        $region43: #{tpu_custom_call.1} parent=35 // pred_region
          %s442 = ssub.s32 128, 128
          %443 = vsyncadd %s434, %s442
          %s444 = sadd.s32 %s26, %s25
          %s445 = sadd.s32 %s444, %s24
          %s446 = smul.addr %s445, 128
          %s447 = scalar_lea.hbm %s4, %s446
          %s449 = sshll.u32 %s437, 4
          %s450 = int_to_ptr.vmem [resolvable:$true] %s449
          %452 = dma.vmem_to_hbm [thread:$0]  %s450, 128, %s447, %s434
        $region44: #{tpu_custom_call.1} parent=35 // pred_fallthru
          _
      $region36: #{tpu_custom_call.1} parent=5 // pred_fallthru
        _
      %p453 = scmp.le.s32.totalorder 2, %s14
      // Predicated region
      $region45: #{tpu_custom_call.1} parent=5 // pred_check
        %p454 = pneg %p453
      $region46: #{tpu_custom_call.1} parent=5 // pred_check_branch
        %456 = sbr.rel (%p454) target = $region48
      $region47: #{tpu_custom_call.1} parent=5 // pred_region
        %s457 = ssub.s32 %s14, 2
        // Predicated region
        $region49: #{tpu_custom_call.1} parent=47 // pred_check
          %p458 = pneg %p178
        $region50: #{tpu_custom_call.1} parent=47 // pred_check_branch
          %460 = sbr.rel (%p458) target = $region52
        $region51: #{tpu_custom_call.1} parent=47 // pred_region
          %s461 = sand.u32 %s163, 1
          %s462 = scalar_lea.sflag [#allocation4], %s461
          %s463 = sand.u32 %s163, 1
          %s464 = smul.addr %s463, 8
          %s465 = scalar_lea.vmem [#allocation5], %s464
          %466 = dma.done %s462, 128
        $region52: #{tpu_custom_call.1} parent=47 // pred_fallthru
          _
      $region48: #{tpu_custom_call.1} parent=5 // pred_fallthru
        _
    $region6: #{tpu_custom_call.1} parent=1 // loop_footer
      %s18 = sadd.s32 1, %s14
    $region7: #{tpu_custom_call.1} parent=1 // loop_footer_branch
      %13 = sbr.rel target = $region3
    $region8: #{tpu_custom_call.1} parent=1 // loop_exit
      _
    %467 = vsyncpa [#allocation3], 1
    %s468 = scalar_lea.sflag [#allocation3], 1
    %469 = vsyncpa %s468, 1
    %470 = vsyncpa [#allocation4], 1
    %s471 = scalar_lea.sflag [#allocation4], 1
    %472 = vsyncpa %s471, 1

</llo_original>
